<compile_context>
chip_gen: v6e
topology: v6e:2x2x1
jax: 0.10.0
libtpu: 0.0.40
codegen_flags: <defaults>
</compile_context>

<pallas_src>
import functools

import jax
import jax.numpy as jnp
from jax import lax
from jax.experimental import pallas as pl
from jax.experimental.pallas import tpu as pltpu


def _round_up(x, m):
    return (x + m - 1) // m * m


def _divisor_tile(total, target, unit):
    """Largest divisor of `total` that is a multiple of `unit` and <= max(target, unit).
    `total` must itself be a multiple of `unit`."""
    target = max(target, unit)
    if total <= target:
        return total
    t = (target // unit) * unit
    while t > unit:
        if total % t == 0:
            return t
        t -= unit
    return unit


def _chip_config():
    """Return (vmem_capacity_bytes, big_vmem, two_tensorcores) with safe fallbacks."""
    kind = ""
    try:
        kind = jax.devices()[0].device_kind.lower()
    except Exception:
        pass
    is_v7ish = "7" in kind
    vmem_cap = None
    try:
        vmem_cap = int(pltpu.get_tpu_info().vmem_capacity_bytes)
    except Exception:
        vmem_cap = None
    if vmem_cap is None:
        # v5e/v6e: 128 MiB VMEM per TensorCore; v7x: 64 MiB.
        vmem_cap = (64 << 20) if is_v7ish else (128 << 20)
    if is_v7ish:
        vmem_cap = min(vmem_cap, 64 << 20)
    big_vmem = (not is_v7ish) and vmem_cap >= (100 << 20)
    two_tc = is_v7ish or vmem_cap <= (64 << 20)
    return vmem_cap, big_vmem, two_tc


def _unet_down_norm_kernel(patch_ref, w_ref, o_ref, slab_ref, *,
                           tile_p, true_p, inv_p, eps, neg_slope):
    # patch_ref: (1, K, TP) bf16   w_ref: (CT, K) bf16
    # o_ref:     (1, CT, P_pad)    slab_ref: (CT, P_pad) f32 scratch
    pt = pl.program_id(2)

    # Conv (im2col matmul) for this spatial tile; f32 accumulation on the MXU.
    y = jnp.dot(w_ref[...], patch_ref[0],
                preferred_element_type=jnp.float32)            # (CT, TP)
    start = pl.multiple_of(pt * tile_p, tile_p)
    slab_ref[:, pl.ds(start, tile_p)] = y

    @pl.when(pt == pl.num_programs(2) - 1)
    def _():
        ys = slab_ref[...]                                      # (CT, P_pad) f32
        p_pad = ys.shape[-1]
        if p_pad != true_p:
            valid = lax.broadcasted_iota(jnp.int32, ys.shape, 1) < true_p
            ysum = jnp.where(valid, ys, 0.0)
        else:
            valid = None
            ysum = ys
        # Two-pass mean / variance (numerically safe) over the true spatial extent.
        mean = jnp.sum(ysum, axis=1, keepdims=True) * inv_p     # (CT, 1)
        c = ys - mean
        if valid is not None:
            c = jnp.where(valid, c, 0.0)
        var = jnp.sum(c * c, axis=1, keepdims=True) * inv_p
        z = c * lax.rsqrt(var + eps)
        z = jnp.maximum(z, neg_slope * z)                       # LeakyReLU(0.2)
        o_ref[0] = z.astype(o_ref.dtype)


def _unet_down_plain_kernel(patch_ref, w_ref, o_ref, *, neg_slope):
    # normalize=False: conv + LeakyReLU, tile-local, no cross-tile state.
    y = jnp.dot(w_ref[...], patch_ref[0],
                preferred_element_type=jnp.float32)             # (CT, TP)
    z = jnp.maximum(y, neg_slope * y)
    o_ref[0] = z.astype(o_ref.dtype)


def unet_down(x, weight, *, normalize=True, eps=1e-5, neg_slope=0.2,
              compute_dtype=jnp.bfloat16, out_dtype=None,
              max_spatial_tile=None, max_channel_tile=None):
    """x: (N, Cin, H, W) NCHW.  weight: (Cout, Cin, 4, 4).  Returns (N, Cout, H/2, W/2).

    out_dtype defaults to x.dtype; pass jnp.bfloat16 to halve output writeback (v5e)."""
    N, Cin, H, W = x.shape
    Cout = weight.shape[0]
    KH = KW = 4
    assert weight.shape == (Cout, Cin, KH, KW)
    assert H % 2 == 0 and W % 2 == 0, "UNetDown expects even H and W"
    OH, OW = H // 2, W // 2
    P = OH * OW
    K = Cin * KH * KW                       # multiple of 16 -> already sublane aligned
    P_pad = _round_up(P, 128)
    Cout_p = _round_up(Cout, 8)
    out_dtype = x.dtype if out_dtype is None else out_dtype
    in_item = jnp.dtype(compute_dtype).itemsize
    out_item = jnp.dtype(out_dtype).itemsize

    vmem_cap, big_vmem, two_tc = _chip_config()

    # ---- tile selection -----------------------------------------------------------------
    tp_target = 1024 if big_vmem else 512
    if max_spatial_tile is not None:
        tp_target = min(tp_target, max_spatial_tile)
    TP = _divisor_tile(P_pad, tp_target, 128)
    patch_budget = (32 << 20) if big_vmem else (16 << 20)
    while TP > 128 and 2 * K * TP * in_item > patch_budget:
        TP = _divisor_tile(P_pad, TP - 128, 128)

    ct_target = 512 if big_vmem else 256    # n_ct == 1 for typical UNet Cout -> patches stream once
    if max_channel_tile is not None:
        ct_target = min(ct_target, max_channel_tile)
    CT = _divisor_tile(Cout_p, ct_target, 8)
    if two_tc and N * (Cout_p // CT) < 2 and Cout_p >= 16:
        # Give both TensorCores at least one "parallel" block when N == 1 (v7x-class).
        CT = _divisor_tile(Cout_p, Cout_p // 2, 8)
    if normalize:
        # f32 y-slab + resident output block must fit next to the pipeline buffers.
        norm_budget = (64 << 20) if big_vmem else (24 << 20)
        while CT > 8 and CT * P_pad * (4 + 2 * out_item) > norm_budget:
            CT = _divisor_tile(Cout_p, CT - 8, 8)

    n_pt = P_pad // TP
    n_ct = Cout_p // CT

    # ---- operand layout (K-major), cheap wrapper glue -------------------------------------
    # TODO(synk): move this patch construction into the kernel (pl.ANY + manual DMA) to
    # remove the remaining im2col HBM round trip.
    xq = x.astype(compute_dtype)
    xp = jnp.pad(xq, ((0, 0), (0, 0), (1, 1), (1, 1)))
    cols = [xp[:, :, kh:kh + 2 * OH:2, kw:kw + 2 * OW:2]        # (N, Cin, OH, OW) each
            for kh in range(KH) for kw in range(KW)]
    patches = jnp.stack(cols, axis=2)                            # (N, Cin, 16, OH, OW)
    patches = patches.reshape(N, K, P)                           # contiguity-preserving
    if P_pad != P:
        patches = jnp.pad(patches, ((0, 0), (0, 0), (0, P_pad - P)))

    w_mat = weight.reshape(Cout, K).astype(compute_dtype)        # (ci, kh, kw) ordering matches
    if Cout_p != Cout:
        w_mat = jnp.pad(w_mat, ((0, Cout_p - Cout), (0, 0)))     # (Cout_p, K)

    # ---- pallas_call -----------------------------------------------------------------------
    grid = (N, n_ct, n_pt)
    patch_spec = pl.BlockSpec((1, K, TP), lambda n, j, pt: (n, 0, pt))
    w_spec = pl.BlockSpec((CT, K), lambda n, j, pt: (j, 0))

    if normalize:
        kernel = functools.partial(
            _unet_down_norm_kernel, tile_p=TP, true_p=P, inv_p=1.0 / P,
            eps=eps, neg_slope=neg_slope)
        out_spec = pl.BlockSpec((1, CT, P_pad), lambda n, j, pt: (n, j, 0))
        scratch = [pltpu.VMEM((CT, P_pad), jnp.float32)]
        semantics = ("parallel", "parallel", "arbitrary")
    else:
        kernel = functools.partial(_unet_down_plain_kernel, neg_slope=neg_slope)
        out_spec = pl.BlockSpec((1, CT, TP), lambda n, j, pt: (n, j, pt))
        scratch = []
        semantics = ("parallel", "parallel", "parallel")

    est = (2 * K * TP * in_item                                   # patch tile, double buffered
           + 2 * CT * K * in_item                                 # weight tile (conservative x2)
           + 2 * CT * (P_pad if normalize else TP) * out_item     # output block
           + (CT * P_pad * 4 if normalize else 0)                 # f32 slab
           + (2 << 20))
    cap = (100 << 20) if big_vmem else (48 << 20)                 # 48 MB cap on 64-MiB chips
    cap = min(cap, max(vmem_cap - (8 << 20), 32 << 20))
    vmem_limit = int(min(max(est, 32 << 20), cap))

    out = pl.pallas_call(
        kernel,
        out_shape=jax.ShapeDtypeStruct((N, Cout_p, P_pad), out_dtype),
        grid_spec=pltpu.PrefetchScalarGridSpec(
            num_scalar_prefetch=0,
            grid=grid,
            in_specs=[patch_spec, w_spec],
            out_specs=out_spec,
            scratch_shapes=scratch),
        compiler_params=pltpu.CompilerParams(
            dimension_semantics=semantics,
            vmem_limit_bytes=vmem_limit),
    )(patches, w_mat)

    # (N, Cout_p, P_pad) is channel-major already: slice padding, free reshape to NCHW.
    out = out[:, :Cout, :P].reshape(N, Cout, OH, OW)
    return out


def _reference(x, weight, *, normalize=True, eps=1e-5, neg_slope=0.2,
               compute_dtype=jnp.bfloat16):
    # Reference on the same bf16-rounded operands the kernel consumes.
    xq = x.astype(compute_dtype).astype(jnp.float32)
    wq = weight.astype(compute_dtype).astype(jnp.float32)
    y = lax.conv_general_dilated(
        xq, wq, window_strides=(2, 2), padding=((1, 1), (1, 1)),
        dimension_numbers=("NCHW", "OIHW", "NCHW"),
        precision=lax.Precision.HIGHEST)
    if normalize:
        mean = jnp.mean(y, axis=(2, 3), keepdims=True)
        var = jnp.var(y, axis=(2, 3), keepdims=True)
        y = (y - mean) * lax.rsqrt(var + eps)
    return jnp.where(y >= 0, y, neg_slope * y)


if __name__ == "__main__":
    key = jax.random.PRNGKey(0)
    k1, k2, k3, k4 = jax.random.split(key, 4)

    # ---- Test 1: small demo shapes (P=64 -> padded to 128, masked stats) ----
    N, Cin, H, W, Cout = 2, 4, 16, 16, 8
    x = jax.random.normal(k1, (N, Cin, H, W), dtype=jnp.float32)
    fan_in = Cin * 16
    w = jax.random.normal(k2, (Cout, Cin, 4, 4), dtype=jnp.float32) * (fan_in ** -0.5)

    out = jax.block_until_ready(unet_down(x, w, normalize=True))
    ref = _reference(x, w, normalize=True)
    assert out.shape == (N, Cout, H // 2, W // 2), out.shape
    assert jnp.allclose(out, ref, atol=3e-3, rtol=3e-3), float(jnp.max(jnp.abs(out - ref)))

    out_nn = jax.block_until_ready(unet_down(x, w, normalize=False))
    ref_nn = _reference(x, w, normalize=False)
    assert jnp.allclose(out_nn, ref_nn, atol=3e-3, rtol=3e-3), \
        float(jnp.max(jnp.abs(out_nn - ref_nn)))

    # ---- Test 2: Cout padding (12->16), N=1 (exercises the 2-TC channel split when
    #              applicable), larger spatial extent ----
    N2, Cin2, H2, W2, Cout2 = 1, 3, 64, 64, 12
    x2 = jax.random.normal(k3, (N2, Cin2, H2, W2), dtype=jnp.float32)
    fan_in2 = Cin2 * 16
    w2 = jax.random.normal(k4, (Cout2, Cin2, 4, 4), dtype=jnp.float32) * (fan_in2 ** -0.5)

    out2 = jax.block_until_ready(unet_down(x2, w2, normalize=True))
    ref2 = _reference(x2, w2, normalize=True)
    assert out2.shape == (N2, Cout2, H2 // 2, W2 // 2), out2.shape
    assert jnp.allclose(out2, ref2, atol=3e-3, rtol=3e-3), float(jnp.max(jnp.abs(out2 - ref2)))

    # ---- Test 3: force multi-tile spatial accumulation (n_pt=4) and multiple channel
    #              tiles (n_ct=2) to exercise the resident-slab instance-norm path ----
    out3 = jax.block_until_ready(
        unet_down(x2, w2, normalize=True, max_spatial_tile=256, max_channel_tile=8))
    assert jnp.allclose(out3, ref2, atol=3e-3, rtol=3e-3), float(jnp.max(jnp.abs(out3 - ref2)))

    print("KERNEL_OK")
</pallas_src>

<mosaic_0001>
module attributes {stable_mosaic.version = 11 : i64} {
  func.func @_unet_down_norm_kernel(%arg0: i32, %arg1: i32, %arg2: i32, %arg3: memref<1x64x128xbf16, #tpu.memory_space<vmem>>, %arg4: memref<8x64xbf16, #tpu.memory_space<vmem>>, %arg5: memref<1x8x128xf32, #tpu.memory_space<vmem>>, %arg6: memref<8x128xf32, #tpu.memory_space<vmem>>) attributes {dimension_semantics = [#tpu.dimension_semantics<parallel>, #tpu.dimension_semantics<parallel>, #tpu.dimension_semantics<arbitrary>], iteration_bounds = array<i64: 2, 1, 1>, scalar_prefetch = 0 : i64, scratch_operands = 1 : i64, tpu.core_type = #tpu.core_type<tc>, window_params = [{transform_indices = @transform_0, window_bounds = array<i64: 1, 64, 128>}, {transform_indices = @transform_1, window_bounds = array<i64: 8, 64>}, {transform_indices = @transform_2, window_bounds = array<i64: 1, 8, 128>}]} {
    %c0 = arith.constant 0 : index
    %c0_0 = arith.constant 0 : index
    %0 = vector.load %arg4[%c0, %c0_0] : memref<8x64xbf16, #tpu.memory_space<vmem>>, vector<8x64xbf16>
    %c0_1 = arith.constant 0 : index
    %c0_2 = arith.constant 0 : index
    %c0_3 = arith.constant 0 : index
    %1 = vector.load %arg3[%c0_1, %c0_2, %c0_3] : memref<1x64x128xbf16, #tpu.memory_space<vmem>>, vector<1x64x128xbf16>
    %2 = vector.shape_cast %1 : vector<1x64x128xbf16> to vector<64x128xbf16>
    %cst = arith.constant dense<0.000000e+00> : vector<8x128xf32>
    %3 = tpu.matmul %0, %2, %cst {dimension_numbers = #tpu.dot_dimension_numbers<[1], [0], [0], [1], [0, 0, 1, 1], [], []>} : vector<8x64xbf16>, vector<64x128xbf16>, vector<8x128xf32> -> vector<8x128xf32>
    %c128_i32 = arith.constant 128 : i32
    %4 = arith.muli %arg2, %c128_i32 : i32
    %5 = tpu.assume_multiple %4, 128 : i32
    %c0_4 = arith.constant 0 : index
    %6 = arith.index_cast %5 : i32 to index
    %7 = vector.load %arg6[%c0_4, %6] : memref<8x128xf32, #tpu.memory_space<vmem>>, vector<8x128xf32>
    tpu.vector_store %arg6[%c0_4, %6], %3 {strides = array<i32>} : memref<8x128xf32, #tpu.memory_space<vmem>>, vector<8x128xf32>,
    %c0_i32 = arith.constant 0 : i32
    %8 = arith.cmpi eq, %arg2, %c0_i32 : i32
    %9 = arith.extui %8 : i1 to i32
    %c0_i32_5 = arith.constant 0 : i32
    %10 = arith.cmpi ne, %9, %c0_i32_5 : i32
    scf.if %10 {
      %c0_6 = arith.constant 0 : index
      %c0_7 = arith.constant 0 : index
      %11 = vector.load %arg6[%c0_6, %c0_7] : memref<8x128xf32, #tpu.memory_space<vmem>>, vector<8x128xf32>
      %12 = tpu.iota {dimensions = array<i32: 1>} : vector<8x128xi32>
      %c64_i32 = arith.constant 64 : i32
      %13 = vector.broadcast %c64_i32 : i32 to vector<8x128xi32>
      %14 = arith.cmpi slt, %12, %13 : vector<8x128xi32>
      %cst_8 = arith.constant 0.000000e+00 : f32
      %15 = vector.broadcast %cst_8 : f32 to vector<8x128xf32>
      %16 = arith.select %14, %11, %15 : vector<8x128xi1>, vector<8x128xf32>
      %cst_9 = arith.constant dense<0.000000e+00> : vector<8xf32>
      %17 = vector.multi_reduction <add>, %16, %cst_9 [1] : vector<8x128xf32> to vector<8xf32>
      %18 = vector.shape_cast %17 : vector<8xf32> to vector<8x1xf32>
      %cst_10 = arith.constant 1.562500e-02 : f32
      %19 = vector.broadcast %cst_10 : f32 to vector<8x1xf32>
      %20 = arith.mulf %18, %19 : vector<8x1xf32>
      %21 = vector.broadcast %20 : vector<8x1xf32> to vector<8x128xf32>
      %22 = arith.subf %11, %21 : vector<8x128xf32>
      %cst_11 = arith.constant 0.000000e+00 : f32
      %23 = vector.broadcast %cst_11 : f32 to vector<8x128xf32>
      %24 = arith.select %14, %22, %23 : vector<8x128xi1>, vector<8x128xf32>
      %25 = arith.mulf %24, %24 : vector<8x128xf32>
      %cst_12 = arith.constant dense<0.000000e+00> : vector<8xf32>
      %26 = vector.multi_reduction <add>, %25, %cst_12 [1] : vector<8x128xf32> to vector<8xf32>
      %27 = vector.shape_cast %26 : vector<8xf32> to vector<8x1xf32>
      %cst_13 = arith.constant 1.562500e-02 : f32
      %28 = vector.broadcast %cst_13 : f32 to vector<8x1xf32>
      %29 = arith.mulf %27, %28 : vector<8x1xf32>
      %cst_14 = arith.constant 9.99999974E-6 : f32
      %30 = vector.broadcast %cst_14 : f32 to vector<8x1xf32>
      %31 = arith.addf %29, %30 : vector<8x1xf32>
      %32 = math.rsqrt %31 : vector<8x1xf32>
      %33 = vector.broadcast %32 : vector<8x1xf32> to vector<8x128xf32>
      %34 = arith.mulf %24, %33 : vector<8x128xf32>
      %cst_15 = arith.constant 2.000000e-01 : f32
      %35 = vector.broadcast %cst_15 : f32 to vector<8x128xf32>
      %36 = arith.mulf %35, %34 : vector<8x128xf32>
      %37 = arith.maximumf %34, %36 : vector<8x128xf32>
      %c0_16 = arith.constant 0 : index
      %c0_17 = arith.constant 0 : index
      %c0_18 = arith.constant 0 : index
      %38 = vector.load %arg5[%c0_16, %c0_17, %c0_18] : memref<1x8x128xf32, #tpu.memory_space<vmem>>, vector<1x8x128xf32>
      %39 = vector.shape_cast %38 : vector<1x8x128xf32> to vector<8x128xf32>
      %40 = vector.shape_cast %37 : vector<8x128xf32> to vector<1x8x128xf32>
      tpu.vector_store %arg5[%c0_16, %c0_17, %c0_18], %40 {strides = array<i32>} : memref<1x8x128xf32, #tpu.memory_space<vmem>>, vector<1x8x128xf32>,
    } else {
    }
    return
  }
  func.func @transform_0(%arg0: i32, %arg1: i32, %arg2: i32) -> (i32, i32, i32) {
    %c0_i32 = arith.constant 0 : i32
    %c0_i32_0 = arith.constant 0 : i32
    return %arg0, %c0_i32, %arg2 : i32, i32, i32
  }
  func.func @transform_1(%arg0: i32, %arg1: i32, %arg2: i32) -> (i32, i32) {
    %c0_i32 = arith.constant 0 : i32
    %c0_i32_0 = arith.constant 0 : i32
    return %arg1, %c0_i32 : i32, i32
  }
  func.func @transform_2(%arg0: i32, %arg1: i32, %arg2: i32) -> (i32, i32, i32) {
    %c0_i32 = arith.constant 0 : i32
    %c0_i32_0 = arith.constant 0 : i32
    return %arg0, %arg1, %c0_i32 : i32, i32, i32
  }
}

</mosaic_0001>

<llo_original>
// kernel: tpu_custom_call.1
$region0: #{tpu_custom_call.1}
  #allocation0 [shape = 'u32[]', space=smem, size = 0x4, offset = 0x4, fixed_abs, tag = 'smem constant byte address 0x4 - core index']
  #allocation1 [shape = 'u32[144,128]{1,0:T(1,128)}', space=vmem, size = 0x12000, scoped, tag = 'internal scratch']
  #allocation2 [shape = 'f32[8,128]{1,0:T(8,128)}', space=vmem, size = 0x1000, scoped, tag = 'scratch operand']
  %s0 = inlined_call_operand.hbm [shape: bf16[2,64,128], index: 0, kind: input, shape index: {}]
  %s1 = inlined_call_operand.hbm [shape: bf16[8,64], index: 1, kind: input, shape index: {}]
  %s2 = inlined_call_operand.hbm [shape: f32[2,8,128], index: 2, kind: output, shape index: {}]
  %s3 = sld [smem:[#allocation0]]
  $region53: #{tpu_custom_call.1} parent=0
    _
  %s5 = ssub.s32 1, %s3
  %s6 = scalar_select 0, %s5, %s3
  $region1: #{tpu_custom_call.1} parent=0
    #allocation3 [shape = 'u8[32768]{0}', space=vmem, size = 0x8000, scoped, tag = 'input window, operand 0']
    #allocation4 [shape = 's32[2]{0}', space=sflag, size = 0x8, scoped, tag = 'scoped memory for tpu_custom_call.1']
    #allocation5 [shape = 's32[2]{0}', space=sflag, size = 0x8, scoped, tag = 'scoped memory for tpu_custom_call.1']
    #allocation6 [shape = 'u8[2048]{0}', space=vmem, size = 0x800, scoped, tag = 'input window, operand 1, single buffered']
    #allocation7 [shape = 's32[1]{0}', space=sflag, size = 0x4, scoped, tag = 'scoped memory for tpu_custom_call.1']
    #allocation8 [shape = 'u8[8192]{0}', space=vmem, size = 0x2000, scoped, tag = 'output window, operand 0']
    %7 = vsyncpa [#allocation4], 0
    %s8 = scalar_lea.sflag [#allocation4], 1
    %9 = vsyncpa %s8, 0
    %10 = vsyncpa [#allocation7], 0
    %11 = vsyncpa [#allocation5], 0
    %s12 = scalar_lea.sflag [#allocation5], 1
    %13 = vsyncpa %s12, 0
    loop: start=0, step=1, limit=4
    $region2: #{tpu_custom_call.1} parent=1 // loop_pre_header
      _
    $region3: #{tpu_custom_call.1} parent=1 // loop_header
      %s15 = sphi 0, %s19
      %p16 = scmp.ge.s32.totalorder %s15, 4
      %s22 = sphi 0, %s41
      %s23 = sphi 0, %s37
      %s24 = sphi 0, %s33
      %s25 = sphi 0, %s22
      %s26 = sphi 0, %s23
      %s27 = sphi 0, %s24
      %s28 = sphi 0, %s25
      %s29 = sphi 0, %s26
      %s30 = sphi 0, %s27
      %s46 = sphi 0, %s48
      %s49 = sphi 0, %s46
      %s50 = sphi 0, %s49
      %s66 = sphi 0, %s50
      %s72 = sphi 0, %s74
      %s75 = sphi 0, %s72
      %s76 = sphi 0, %s75
      %s92 = sphi 0, %s76
      %s100 = sphi 0, %s102
      %s103 = sphi 0, %s100
      %s104 = sphi 0, %s103
      %s120 = sphi 0, %s104
    $region4: #{tpu_custom_call.1} parent=1 // loop_header_branch
      %18 = sbr.rel (%p16) target = $region8
    $region5: #{tpu_custom_call.1} parent=1 // loop_body
      %s20 = ssub.s32 %s15, 1
      %s21 = ssub.s32 %s15, 2
      %s31 = sadd.s32 1, %s24
      %p32 = scmp.ge.s32.totalorder %s31, 1
      %s33 = scalar_select %p32, 0, %s31
      %s34 = sadd.s32 1, %s23
      %s35 = scalar_select %p32, %s34, %s23
      %p36 = scmp.ge.s32.totalorder %s35, 1
      %s37 = scalar_select %p36, 0, %s35
      %s38 = sadd.s32 1, %s22
      %s39 = scalar_select %p36, %s38, %s22
      %p40 = scmp.ge.s32.totalorder %s39, 2
      %s41 = scalar_select %p40, 0, %s39
      %s42 = ssub.s32 %s22, %s41
      %s43 = ssub.s32 %s24, %s33
      %s44 = sor.u32 %s42, %s43
      %p45 = scmp.eq.s32.totalorder %s44, 0
      %s47 = sadd.s32 %s46, 1
      %s48 = scalar_select %p45, %s46, %s47
      %p51 = pneg %p45
      %p52 = scmp.eq.s32.totalorder %s15, 1
      %p53 = por %p51, %p52
      %p54 = scmp.ne.s32.totalorder %s46, %s49
      %p55 = scmp.eq.s32.totalorder %s15, 0
      %p56 = por %p54, %p55
      %p57 = scmp.ne.s32.totalorder %s46, %s49
      %p58 = scmp.eq.s32.totalorder %s20, 1
      %p59 = por %p57, %p58
      %p60 = scmp.ne.s32.totalorder %s49, %s50
      %p61 = scmp.eq.s32.totalorder %s20, 0
      %p62 = por %p60, %p61
      %p63 = scmp.ne.s32.totalorder %s49, %s50
      %p64 = scmp.eq.s32.totalorder %s21, 1
      %p65 = por %p63, %p64
      %p67 = scmp.ne.s32.totalorder %s50, %s66
      %p68 = scmp.eq.s32.totalorder %s21, 0
      %p69 = por %p67, %p68
      %s70 = ssub.s32 %s23, %s37
      %p71 = scmp.eq.s32.totalorder %s70, 0
      %s73 = sadd.s32 %s72, 1
      %s74 = scalar_select %p71, %s72, %s73
      %p77 = pneg %p71
      %p78 = scmp.eq.s32.totalorder %s15, 1
      %p79 = por %p77, %p78
      %p80 = scmp.ne.s32.totalorder %s72, %s75
      %p81 = scmp.eq.s32.totalorder %s15, 0
      %p82 = por %p80, %p81
      %p83 = scmp.ne.s32.totalorder %s72, %s75
      %p84 = scmp.eq.s32.totalorder %s20, 1
      %p85 = por %p83, %p84
      %p86 = scmp.ne.s32.totalorder %s75, %s76
      %p87 = scmp.eq.s32.totalorder %s20, 0
      %p88 = por %p86, %p87
      %p89 = scmp.ne.s32.totalorder %s75, %s76
      %p90 = scmp.eq.s32.totalorder %s21, 1
      %p91 = por %p89, %p90
      %p93 = scmp.ne.s32.totalorder %s76, %s92
      %p94 = scmp.eq.s32.totalorder %s21, 0
      %p95 = por %p93, %p94
      %s96 = ssub.s32 %s22, %s41
      %s97 = ssub.s32 %s23, %s37
      %s98 = sor.u32 %s96, %s97
      %p99 = scmp.eq.s32.totalorder %s98, 0
      %s101 = sadd.s32 %s100, 1
      %s102 = scalar_select %p99, %s100, %s101
      %p105 = pneg %p99
      %p106 = scmp.eq.s32.totalorder %s15, 1
      %p107 = por %p105, %p106
      %p108 = scmp.ne.s32.totalorder %s100, %s103
      %p109 = scmp.eq.s32.totalorder %s15, 0
      %p110 = por %p108, %p109
      %p111 = scmp.ne.s32.totalorder %s100, %s103
      %p112 = scmp.eq.s32.totalorder %s20, 1
      %p113 = por %p111, %p112
      %p114 = scmp.ne.s32.totalorder %s103, %s104
      %p115 = scmp.eq.s32.totalorder %s20, 0
      %p116 = por %p114, %p115
      %p117 = scmp.ne.s32.totalorder %s103, %s104
      %p118 = scmp.eq.s32.totalorder %s21, 1
      %p119 = por %p117, %p118
      %p121 = scmp.ne.s32.totalorder %s104, %s120
      %p122 = scmp.eq.s32.totalorder %s21, 0
      %p123 = por %p121, %p122
      %p124 = scmp.le.s32.totalorder 1, %s15
      %p125 = scmp.lt.s32.totalorder %s15, 3
      %p126 = pnand %p124, %p125
      %p127 = pneg %p126
      // Predicated region
      $region9: #{tpu_custom_call.1} parent=5 // pred_check
        _
      $region10: #{tpu_custom_call.1} parent=5 // pred_check_branch
        %129 = sbr.rel (%p126) target = $region12
      $region11: #{tpu_custom_call.1} parent=5 // pred_region
        %s130 = ssub.s32 %s15, 1
        // Predicated region
        $region13: #{tpu_custom_call.1} parent=11 // pred_check
          %p131 = pneg %p88
        $region14: #{tpu_custom_call.1} parent=11 // pred_check_branch
          %133 = sbr.rel (%p131) target = $region16
        $region15: #{tpu_custom_call.1} parent=11 // pred_region
          %s135 = ssub.s32 64, 64
          %136 = vsyncadd [#allocation7], %s135
          %s137 = smul.addr %s26, 64
          %s138 = scalar_lea.hbm %s1, %s137
          %s140 = sshll.u32 [#allocation6], 4
          %s141 = int_to_ptr.vmem [resolvable:$true] %s140
          %143 = dma.hbm_to_vmem [thread:$0]  %s138, 64, %s141, [#allocation7]
        $region16: #{tpu_custom_call.1} parent=11 // pred_fallthru
          _
      $region12: #{tpu_custom_call.1} parent=5 // pred_fallthru
        _
      %p144 = scmp.lt.s32.totalorder %s15, 2
      // Predicated region
      $region17: #{tpu_custom_call.1} parent=5 // pred_check
        %p145 = pneg %p144
      $region18: #{tpu_custom_call.1} parent=5 // pred_check_branch
        %147 = sbr.rel (%p145) target = $region20
      $region19: #{tpu_custom_call.1} parent=5 // pred_region
        // Predicated region
        $region21: #{tpu_custom_call.1} parent=19 // pred_check
          %p148 = pneg %p56
        $region22: #{tpu_custom_call.1} parent=19 // pred_check_branch
          %150 = sbr.rel (%p148) target = $region24
        $region23: #{tpu_custom_call.1} parent=19 // pred_region
          %s151 = sand.u32 %s46, 1
          %s152 = scalar_lea.sflag [#allocation4], %s151
          %s153 = sand.u32 %s46, 1
          %s154 = smul.addr %s153, 32
          %s155 = scalar_lea.vmem [#allocation3], %s154
          %s157 = ssub.s32 512, 512
          %158 = vsyncadd %s152, %s157
          %s159 = smul.addr %s22, 8
          %s160 = sadd.s32 %s24, %s159
          %s161 = smul.addr %s160, 64
          %s162 = scalar_lea.hbm %s0, %s161
          %s163 = sshll.u32 %s155, 4
          %s164 = int_to_ptr.vmem [resolvable:$true] %s163
          %169 = dma.hbm_to_vmem [thread:$0]  %s162, 512, %s164, %s152, 64, 64, 4
        $region24: #{tpu_custom_call.1} parent=19 // pred_fallthru
          _
      $region20: #{tpu_custom_call.1} parent=5 // pred_fallthru
        _
      %p170 = scmp.le.s32.totalorder 1, %s15
      %p171 = scmp.lt.s32.totalorder %s15, 3
      %p172 = pnand %p170, %p171
      %p173 = pneg %p172
      // Predicated region
      $region25: #{tpu_custom_call.1} parent=5 // pred_check
        _
      $region26: #{tpu_custom_call.1} parent=5 // pred_check_branch
        %175 = sbr.rel (%p172) target = $region28
      $region27: #{tpu_custom_call.1} parent=5 // pred_region
        %s176 = ssub.s32 %s15, 1
        %s177 = sand.u32 %s49, 1
        %s178 = scalar_lea.sflag [#allocation4], %s177
        %s179 = sand.u32 %s49, 1
        %s180 = smul.addr %s179, 32
        %s181 = scalar_lea.vmem [#allocation3], %s180
        // Predicated region
        $region29: #{tpu_custom_call.1} parent=27 // pred_check
          %p182 = pneg %p62
        $region30: #{tpu_custom_call.1} parent=27 // pred_check_branch
          %184 = sbr.rel (%p182) target = $region32
        $region31: #{tpu_custom_call.1} parent=27 // pred_region
          %185 = dma.done %s178, 512
        $region32: #{tpu_custom_call.1} parent=27 // pred_fallthru
          _
        // Predicated region
        $region33: #{tpu_custom_call.1} parent=27 // pred_check
          %p186 = pneg %p88
        $region34: #{tpu_custom_call.1} parent=27 // pred_check_branch
          %188 = sbr.rel (%p186) target = $region36
        $region35: #{tpu_custom_call.1} parent=27 // pred_region
          %189 = dma.done [#allocation7], 64
        $region36: #{tpu_custom_call.1} parent=27 // pred_fallthru
          _
        %s190 = sand.u32 %s49, 1
        %s191 = scalar_lea.sflag [#allocation4], %s190
        %s192 = sand.u32 %s49, 1
        %s193 = smul.addr %s192, 32
        %s194 = scalar_lea.vmem [#allocation3], %s193
        %p195 = pneg %p62
        %p196 = pneg %p59
        %p197 = pneg %p88
        %p198 = pneg %p85
        %p199 = pneg %p116
        %p200 = pneg %p113
        %s201 = sand.u32 %s103, 1
        %s202 = scalar_lea.sflag [#allocation5], %s201
        %s203 = sand.u32 %s103, 1
        %s204 = smul.addr %s203, 8
        %s205 = scalar_lea.vmem [#allocation8], %s204
        %v207 = vld [vmem:[#allocation6] sm:$0xf]
        %v208 = vld [vmem:[%s181] sm:$0xf]
        %v209 = vld [vmem:[%s181 + $0x4] sm:$0xf]
        %v210 = vld [vmem:[%s181 + $0x8] sm:$0xf]
        %v211 = vld [vmem:[%s181 + $0xc] sm:$0xf]
        %v212 = vld [vmem:[%s181 + $0x10] sm:$0xf]
        %v213 = vld [vmem:[%s181 + $0x14] sm:$0xf]
        %v214 = vld [vmem:[%s181 + $0x18] sm:$0xf]
        %v215 = vld [vmem:[%s181 + $0x1c] sm:$0xf]
        %v224 = vunpack.c.l.b16 %v208
        %v225 = vunpack.c.l.b16 %v209
        %v226 = vunpack.c.l.b16 %v210
        %v227 = vunpack.c.l.b16 %v211
        %v228 = vunpack.c.l.b16 %v212
        %v229 = vunpack.c.l.b16 %v213
        %v230 = vunpack.c.l.b16 %v214
        %v231 = vunpack.c.l.b16 %v215
        %v232 = vpack.c.b16 %v225, %v224
        %v233 = vpack.c.b16 %v227, %v226
        %v234 = vpack.c.b16 %v229, %v228
        %v235 = vpack.c.b16 %v231, %v230
        %vm240 = vcmask 523264
        %v242 = vsel %vm240, %v207, 0
        %244 = vmatprep.subr.bf16.mxu0 0
        %245 = vmatpush1.bf16.msra.mxu0 0
        %246 = vmatprep.subr.bf16.mxu0 0
        %247 = vmatpush1.bf16.msra.mxu0 0
        %248 = vmatprep.subr.bf16.mxu0 0
        %249 = vmatpush1.bf16.msra.mxu0 0
        %250 = vmatprep.subr.bf16.mxu0 0
        %251 = vmatpush1.bf16.msra.mxu0 0
        %252 = vmatprep.subr.bf16.mxu0 0
        %253 = vmatpush1.bf16.msra.mxu0 %v235
        %254 = vmatprep.subr.bf16.mxu0 0
        %255 = vmatpush1.bf16.msra.mxu0 %v234
        %256 = vmatprep.subr.bf16.mxu0 0
        %257 = vmatpush1.bf16.msra.mxu0 %v233
        %258 = vmatprep.subr.bf16.mxu0 0
        %259 = vmatpush1.bf16.msra.mxu0 %v232
        %260 = vmatprep.subr.bf16.mxu0 0
        %261 = vmatpush2.bf16.msra.mxu0 0
        %262 = vmatprep.subr.bf16.mxu0 0
        %263 = vmatpush2.bf16.msra.mxu0 0
        %264 = vmatprep.subr.bf16.mxu0 0
        %265 = vmatpush2.bf16.msra.mxu0 0
        %266 = vmatprep.subr.bf16.mxu0 0
        %267 = vmatpush2.bf16.msra.mxu0 0
        %268 = vmatprep.subr.bf16.mxu0 0
        %269 = vmatpush2.bf16.msra.mxu0 0
        %270 = vmatprep.subr.bf16.mxu0 0
        %271 = vmatpush2.bf16.msra.mxu0 0
        %272 = vmatprep.subr.bf16.mxu0 0
        %273 = vmatpush2.bf16.msra.mxu0 0
        %274 = vmatprep.subr.bf16.mxu0 0
        %275 = vmatpush2.bf16.msra.mxu0 0
        %276 = vmatprep.mubr.bf16.mxu0 0
        %277 = vmatmul.mubr.bf16.gmra.mxu0 %v242
        %v278 = vpop.f32.mrf.mxu0
        %v279 = vadd.f32 0.0, %v278
        %v280 = vpop.f32.mrf.mxu0
        %v281 = vpop.f32.mrf.mxu0
        %v282 = vpop.f32.mrf.mxu0
        %283 = vdwg.mxu0
        %s284 = smul.u32 %s27, 128
        %s285 = sshra.s32 %s284, 7
        %s286 = sand.u32 %s284, 127
        %s287 = scalar_lea.vmem [#allocation2], %s285
        %288 = vst [vmem:[%s287] sm:$0xff] %v279
        %p289 = scmp.eq.s32.totalorder %s27, 0
        // Predicated region
        $region37: #{tpu_custom_call.1} parent=27 // pred_check
          %p290 = pneg %p289
        $region38: #{tpu_custom_call.1} parent=27 // pred_check_branch
          %292 = sbr.rel (%p290) target = $region40
        $region39: #{tpu_custom_call.1} parent=27 // pred_region
          %v293 = vld [vmem:[#allocation2] sm:$0xff]
          %v294 = vlaneseq
          %v295 = vand.u32 %v294, 127
          %vm296 = vcmp.lt.s32.totalorder %v295, 64
          %v297 = vsel %vm296, %v293, 0.0
          %298 = vadd.xlane.f32.xlu0 %v297
          %v299 = vpop.xlane.xlu0 %298
          %v300 = vmul.f32 %v299, 0.015625
          %v301 = vsub.f32 %v293, %v300
          %v302 = vsel %vm296, %v301, 0.0
          %v303 = vmul.f32 %v302, %v302
          %304 = vadd.xlane.f32.xlu0 %v303
          %v305 = vpop.xlane.xlu0 %304
          %v306 = vmul.f32 %v305, 0.015625
          %v307 = vadd.f32 %v306, 1e-05
          %v308 = vrsqrt.pop %v307
          %v309 = vmul.f32 %v302, %v308
          %v310 = vmul.f32 %v309, 0.2
          %v311 = vmax.f32 %v309, %v310
          %312 = vst [vmem:[%s205] sm:$0xff] %v311
        $region40: #{tpu_custom_call.1} parent=27 // pred_fallthru
          _
        %s313 = sand.u32 %s103, 1
        %s314 = scalar_lea.sflag [#allocation5], %s313
        %s315 = sand.u32 %s103, 1
        %s316 = smul.addr %s315, 8
        %s317 = scalar_lea.vmem [#allocation8], %s316
        // Predicated region
        $region41: #{tpu_custom_call.1} parent=27 // pred_check
          %p318 = pneg %p113
        $region42: #{tpu_custom_call.1} parent=27 // pred_check_branch
          %320 = sbr.rel (%p318) target = $region44
        $region43: #{tpu_custom_call.1} parent=27 // pred_region
          %s322 = ssub.s32 128, 128
          %323 = vsyncadd %s314, %s322
          %s324 = sadd.s32 %s26, %s25
          %s325 = smul.addr %s324, 128
          %s326 = scalar_lea.hbm %s2, %s325
          %s328 = sshll.u32 %s317, 4
          %s329 = int_to_ptr.vmem [resolvable:$true] %s328
          %331 = dma.vmem_to_hbm [thread:$0]  %s329, 128, %s326, %s314
        $region44: #{tpu_custom_call.1} parent=27 // pred_fallthru
          _
      $region28: #{tpu_custom_call.1} parent=5 // pred_fallthru
        _
      %p332 = scmp.le.s32.totalorder 2, %s15
      // Predicated region
      $region45: #{tpu_custom_call.1} parent=5 // pred_check
        %p333 = pneg %p332
      $region46: #{tpu_custom_call.1} parent=5 // pred_check_branch
        %335 = sbr.rel (%p333) target = $region48
      $region47: #{tpu_custom_call.1} parent=5 // pred_region
        %s336 = ssub.s32 %s15, 2
        // Predicated region
        $region49: #{tpu_custom_call.1} parent=47 // pred_check
          %p337 = pneg %p119
        $region50: #{tpu_custom_call.1} parent=47 // pred_check_branch
          %339 = sbr.rel (%p337) target = $region52
        $region51: #{tpu_custom_call.1} parent=47 // pred_region
          %s340 = sand.u32 %s104, 1
          %s341 = scalar_lea.sflag [#allocation5], %s340
          %s342 = sand.u32 %s104, 1
          %s343 = smul.addr %s342, 8
          %s344 = scalar_lea.vmem [#allocation8], %s343
          %345 = dma.done %s341, 128
        $region52: #{tpu_custom_call.1} parent=47 // pred_fallthru
          _
      $region48: #{tpu_custom_call.1} parent=5 // pred_fallthru
        _
    $region6: #{tpu_custom_call.1} parent=1 // loop_footer
      %s19 = sadd.s32 1, %s15
    $region7: #{tpu_custom_call.1} parent=1 // loop_footer_branch
      %14 = sbr.rel target = $region3
    $region8: #{tpu_custom_call.1} parent=1 // loop_exit
      _
    %346 = vsyncpa [#allocation4], 1
    %s347 = scalar_lea.sflag [#allocation4], 1
    %348 = vsyncpa %s347, 1
    %349 = vsyncpa [#allocation7], 1
    %350 = vsyncpa [#allocation5], 1
    %s351 = scalar_lea.sflag [#allocation5], 1
    %352 = vsyncpa %s351, 1

</llo_original>
